<compile_context>
chip_gen: v6e
topology: v6e:2x2x1
jax: 0.10.0
libtpu: 0.0.40
codegen_flags: <defaults>
</compile_context>

<pallas_src>
import functools
import math

import jax
import jax.numpy as jnp
from jax.experimental import pallas as pl
from jax.experimental.pallas import tpu as pltpu


# ----------------------------- Pallas kernel ---------------------------------

def _rel_scale_kernel(w_ref, o_ref, *, scale):
    """w_ref: (n, K*D) stacked embedding tables; o_ref: (n, K*D) scaled tables.

    o = w * sqrt(d_model).  The num_heads repeat is deliberately left to the caller
    (broadcast over heads is free for the downstream consumer; materializing it here
    would multiply HBM write traffic by num_heads for no benefit).
    """
    # TODO(synk): nn.Dropout is stochastic in train mode; treated as identity (eval / p=0.0).
    o_ref[...] = w_ref[...] * scale


# ----------------------------- pallas_call wrapper ----------------------------

def _get_rel_weights_fused(tables, d_model, num_heads):
    """tables: ordered dict name -> (K, d_model) weight. Returns name -> (1, H, K, D)."""
    names = list(tables.keys())
    n = len(names)
    if n == 0:
        return {}
    K, D = tables[names[0]].shape
    flat = K * D
    scale = float(math.sqrt(d_model))

    # Single stacked, lane-dense input: (n, K*D).  For the default sizes K*D = 256
    # (multiple of 128 -> unmasked full-lane loads/stores).
    stacked = jnp.stack([tables[nm] for nm in names], axis=0).reshape(n, flat)

    kernel = functools.partial(_rel_scale_kernel, scale=scale)
    out = pl.pallas_call(
        kernel,
        out_shape=jax.ShapeDtypeStruct((n, flat), stacked.dtype),
        in_specs=[pl.BlockSpec(memory_space=pltpu.MemorySpace.VMEM)],
        out_specs=pl.BlockSpec(memory_space=pltpu.MemorySpace.VMEM),
    )(stacked)

    # (n, K*D) -> (n, 1, 1, K, D): contiguous view.  The per-head repeat is a broadcast
    # outside the opaque custom call so XLA can fuse it into whatever consumes the tables.
    out = out.reshape(n, 1, 1, K, D)
    return {
        nm: jnp.broadcast_to(out[i], (1, num_heads, K, D))
        for i, nm in enumerate(names)
    }


def fast_rel_embeddings_forward(params, d_model, num_heads, pos_type):
    """FastRelEmbeddings.forward(): returns (rel_q, rel_k, rel_v), None where absent."""
    tables = {}
    if "p2q" in pos_type:
        tables["q"] = params["rel_emb_q"]
    if "p2k" in pos_type:
        tables["k"] = params["rel_emb_k"]
    if "p2v" in pos_type:
        tables["v"] = params["rel_emb_v"]
    outs = _get_rel_weights_fused(tables, d_model, num_heads)
    return outs.get("q"), outs.get("k"), outs.get("v")


# ----------------------------- parameter init ----------------------------------

def init_params(key, k, d_model, pos_type):
    K = 2 * k + 2
    pad = K // 2
    names = []
    if "p2q" in pos_type:
        names.append("rel_emb_q")
    if "p2k" in pos_type:
        names.append("rel_emb_k")
    if "p2v" in pos_type:
        names.append("rel_emb_v")
    keys = jax.random.split(key, max(len(names), 1))
    params = {}
    for nm, kk in zip(names, keys):
        w = jax.random.normal(kk, (K, d_model), jnp.float32)
        # nn.Embedding(padding_idx=K//2) zeroes that row at init.
        params[nm] = w.at[pad].set(0.0)
    return params


# ----------------------------- main ---------------------------------------------

if __name__ == "__main__":
    d_model, num_heads, k = 32, 4, 3
    pos_type = "p2q_p2k_p2v"
    K = 2 * k + 2   # 8

    key = jax.random.PRNGKey(0)
    params = init_params(key, k, d_model, pos_type)

    rel_q, rel_k, rel_v = fast_rel_embeddings_forward(params, d_model, num_heads, pos_type)
    rel_q, rel_k, rel_v = jax.block_until_ready((rel_q, rel_k, rel_v))

    # pure-JAX reference (matches the PyTorch forward exactly)
    def ref(w):
        return jnp.broadcast_to((w * math.sqrt(d_model))[None, None],
                                (1, num_heads, K, d_model))

    for got, w in ((rel_q, params["rel_emb_q"]),
                   (rel_k, params["rel_emb_k"]),
                   (rel_v, params["rel_emb_v"])):
        assert got.shape == (1, num_heads, K, d_model)
        assert jnp.all(jnp.isfinite(got))
        assert jnp.allclose(got, ref(w), atol=1e-6, rtol=1e-6)

    print("KERNEL_OK")
</pallas_src>

<mosaic_0001>
module attributes {stable_mosaic.version = 11 : i64} {
  func.func @_rel_scale_kernel(%arg0: memref<3x256xf32, #tpu.memory_space<vmem>>, %arg1: memref<3x256xf32, #tpu.memory_space<vmem>>) attributes {dimension_semantics = [], scalar_prefetch = 0 : i64, scratch_operands = 0 : i64, tpu.core_type = #tpu.core_type<tc>} {
    %c0 = arith.constant 0 : index
    %c0_0 = arith.constant 0 : index
    %0 = vector.load %arg0[%c0, %c0_0] : memref<3x256xf32, #tpu.memory_space<vmem>>, vector<3x256xf32>
    %cst = arith.constant 5.65685415 : f32
    %1 = vector.broadcast %cst : f32 to vector<3x256xf32>
    %2 = arith.mulf %0, %1 : vector<3x256xf32>
    %c0_1 = arith.constant 0 : index
    %c0_2 = arith.constant 0 : index
    %3 = vector.load %arg1[%c0_1, %c0_2] : memref<3x256xf32, #tpu.memory_space<vmem>>, vector<3x256xf32>
    tpu.vector_store %arg1[%c0_1, %c0_2], %2 {strides = array<i32>} : memref<3x256xf32, #tpu.memory_space<vmem>>, vector<3x256xf32>,
    return
  }
}

</mosaic_0001>

<llo_original>
// kernel: tpu_custom_call.1
$region0: #{tpu_custom_call.1}
  #allocation0 [shape = 'u32[]', space=smem, size = 0x4, offset = 0x4, fixed_abs, tag = 'smem constant byte address 0x4 - core index']
  #allocation1 [shape = 'u32[144,128]{1,0:T(1,128)}', space=vmem, size = 0x12000, scoped, tag = 'internal scratch']
  %s0 = inlined_call_operand.hbm [shape: f32[3,256], index: 0, kind: input, shape index: {}]
  %s1 = inlined_call_operand.hbm [shape: f32[3,256], index: 1, kind: output, shape index: {}]
  %s2 = sld [smem:[#allocation0]]
  $region18: #{tpu_custom_call.1} parent=0
    _
  %s4 = ssub.s32 1, %s2
  %s5 = scalar_select 0, %s4, %s2
  $region1: #{tpu_custom_call.1} parent=0
    #allocation2 [shape = 'u8[4096]{0}', space=vmem, size = 0x1000, scoped, tag = 'input window, operand 0, single buffered']
    #allocation3 [shape = 's32[1]{0}', space=sflag, size = 0x4, scoped, tag = 'scoped memory for tpu_custom_call.1']
    #allocation4 [shape = 's32[1]{0}', space=sflag, size = 0x4, scoped, tag = 'scoped memory for tpu_custom_call.1']
    #allocation5 [shape = 'u8[4096]{0}', space=vmem, size = 0x1000, scoped, tag = 'output window, operand 0, single buffered']
    %6 = vsyncpa [#allocation3], 0
    %7 = vsyncpa [#allocation4], 0
    // Predicated region
    $region2: #{tpu_custom_call.1} parent=1 // pred_check
      _
    $region3: #{tpu_custom_call.1} parent=1 // pred_check_branch
      %9 = sbr.rel (0) target = $region5
    $region4: #{tpu_custom_call.1} parent=1 // pred_region
      %s11 = ssub.s32 128, 128
      %12 = vsyncadd [#allocation3], %s11
      %s14 = sshll.u32 [#allocation2], 4
      %s15 = int_to_ptr.vmem [resolvable:$true] %s14
      %17 = dma.hbm_to_vmem [thread:$0]  %s0, 128, %s15, [#allocation3]
    $region5: #{tpu_custom_call.1} parent=1 // pred_fallthru
      _
    // Predicated region
    $region6: #{tpu_custom_call.1} parent=1 // pred_check
      _
    $region7: #{tpu_custom_call.1} parent=1 // pred_check_branch
      %19 = sbr.rel (0) target = $region9
    $region8: #{tpu_custom_call.1} parent=1 // pred_region
      %20 = dma.done [#allocation3], 128
    $region9: #{tpu_custom_call.1} parent=1 // pred_fallthru
      _
    %v21 = vld [vmem:[#allocation2] sm:$0x77]
    %v22 = vmul.f32 %v21, 5.656854
    %23 = vst [vmem:[#allocation5] sm:$0x77] %v22
    // Predicated region
    $region10: #{tpu_custom_call.1} parent=1 // pred_check
      _
    $region11: #{tpu_custom_call.1} parent=1 // pred_check_branch
      %25 = sbr.rel (0) target = $region13
    $region12: #{tpu_custom_call.1} parent=1 // pred_region
      %s27 = ssub.s32 128, 128
      %28 = vsyncadd [#allocation4], %s27
      %s30 = sshll.u32 [#allocation5], 4
      %s31 = int_to_ptr.vmem [resolvable:$true] %s30
      %33 = dma.vmem_to_hbm [thread:$0]  %s31, 128, %s1, [#allocation4]
    $region13: #{tpu_custom_call.1} parent=1 // pred_fallthru
      _
    // Predicated region
    $region14: #{tpu_custom_call.1} parent=1 // pred_check
      _
    $region15: #{tpu_custom_call.1} parent=1 // pred_check_branch
      %35 = sbr.rel (0) target = $region17
    $region16: #{tpu_custom_call.1} parent=1 // pred_region
      %36 = dma.done [#allocation4], 128
    $region17: #{tpu_custom_call.1} parent=1 // pred_fallthru
      _
    %37 = vsyncpa [#allocation3], 1
    %38 = vsyncpa [#allocation4], 1

</llo_original>
